<compile_context>
chip_gen: v6e
topology: v6e:2x2x1
jax: 0.10.0
libtpu: 0.0.40
codegen_flags: <defaults>
</compile_context>

<pallas_src>
import jax
import jax.numpy as jnp
from jax.experimental import pallas as pl
from jax.experimental.pallas import tpu as pltpu


def _round_up(x, m):
    return ((x + m - 1) // m) * m


def _critic_kernel(s_ref, a_ref, w1_ref, b1_ref, w2s_ref, w2a_ref, b2_ref,
                   w3_ref, b3_ref, out_ref):
    # bf16 operands for the MXU; f32 accumulation + f32 elementwise (v5e-safe).
    s = s_ref[...].astype(jnp.bfloat16)                  # (tb, state_size)
    a = a_ref[...].astype(jnp.bfloat16)                  # (tb, action_size)

    # fcs1: xs = relu(state @ W1 + b1)                    -- MXU
    xs = jnp.dot(s, w1_ref[...], preferred_element_type=jnp.float32)
    xs = jnp.maximum(xs + b1_ref[...], 0.0)              # (tb, fcs1) f32

    # fc2 on cat(xs, action): split-weight trick, both halves on the MXU.
    h = jnp.dot(xs.astype(jnp.bfloat16), w2s_ref[...],
                preferred_element_type=jnp.float32)
    h = h + jnp.dot(a, w2a_ref[...], preferred_element_type=jnp.float32)
    h = jnp.maximum(h + b2_ref[...], 0.0)                # (tb, fc2) f32

    # fc3: q = h @ w3^T + b3, computed as w3 @ h^T so the per-tile result is a
    # lane-dense (1, tb) row (unmasked dense stores instead of a (tb, 1)
    # column).  w3 is replicated to 8 rows for sublane-aligned M; keep row 0.
    h_t = h.T.astype(jnp.bfloat16)                       # (fc2, tb)
    q = jnp.dot(w3_ref[...], h_t, preferred_element_type=jnp.float32)  # (8, tb)
    out_ref[0] = (q[0:1, :] + b3_ref[...]).astype(out_ref.dtype)       # (1, tb)


def critic_ddpg_forward(state, action, params, *, batch_tile=1024):
    """DDPG critic forward pass as a batch-gridded Pallas kernel.

    state : (B, state_size) f32, action : (B, action_size) f32 -> (B, 1) f32.
    """
    B, state_size = state.shape
    action_size = action.shape[1]

    w1, b1 = params["w1"], params["b1"]
    w2s, w2a, b2 = params["w2s"], params["w2a"], params["b2"]
    w3, b3 = params["w3"], params["b3"]
    fcs1_units = w1.shape[1]
    fc2_units = w2s.shape[1]

    state = state.astype(jnp.float32)
    action = action.astype(jnp.float32)

    # ---- batch tiling -------------------------------------------------------
    # Pad the batch only to a sublane multiple (8), never to a full tile.
    b8 = _round_up(B, 8)
    n_tiles = -(-b8 // batch_tile)                 # ceil(b8 / batch_tile)
    if b8 >= 512:
        # v7x has 2 TensorCores: give the "parallel" grid an even number
        # (>= 2) of steps so both cores get balanced work.
        n_tiles = max(n_tiles, 2)
        n_tiles += n_tiles % 2
    tb = _round_up(-(-b8 // n_tiles), 8)           # rows per tile (mult. of 8)
    b_pad = n_tiles * tb                           # total padding <= 8*n_tiles

    if b_pad != B:
        state = jnp.pad(state, ((0, b_pad - B), (0, 0)))
        action = jnp.pad(action, ((0, b_pad - B), (0, 0)))

    def act_spec(cols):
        return pl.BlockSpec((tb, cols), lambda i: (i, 0))

    def const_spec(shape):
        # Constant index_map -> weights/biases loaded once, VMEM-resident.
        return pl.BlockSpec(shape, lambda i: (0, 0))

    flops = 2 * b_pad * (state_size * fcs1_units
                         + (fcs1_units + action_size) * fc2_units
                         + fc2_units)
    bytes_accessed = (
        b_pad * (state_size + action_size) * 4 + b_pad * 4
        + (state_size * fcs1_units + fcs1_units * fc2_units
           + action_size * fc2_units + 8 * fc2_units) * 2
        + (fcs1_units + fc2_units + 1) * 4)

    out = pl.pallas_call(
        _critic_kernel,
        out_shape=jax.ShapeDtypeStruct((n_tiles, 1, tb), jnp.float32),
        grid=(n_tiles,),
        in_specs=[
            act_spec(state_size),                      # state  (tb, S)  f32
            act_spec(action_size),                     # action (tb, A)  f32
            const_spec((state_size, fcs1_units)),      # w1   bf16
            const_spec((1, fcs1_units)),               # b1   f32
            const_spec((fcs1_units, fc2_units)),       # w2s  bf16
            const_spec((action_size, fc2_units)),      # w2a  bf16
            const_spec((1, fc2_units)),                # b2   f32
            const_spec((8, fc2_units)),                # w3   bf16 (row x8)
            const_spec((1, 1)),                        # b3   f32
        ],
        out_specs=pl.BlockSpec((1, 1, tb), lambda i: (i, 0, 0)),
        compiler_params=pltpu.CompilerParams(
            dimension_semantics=("parallel",),
            vmem_limit_bytes=48 * 1024 * 1024),
        cost_estimate=pl.CostEstimate(
            flops=flops, transcendentals=0, bytes_accessed=bytes_accessed),
    )(state, action, w1, b1, w2s, w2a, b2, w3, b3)

    return out.reshape(b_pad, 1)[:B]


def init_params(key, state_size, action_size, fcs1_units=256, fc2_units=128):
    """Parameters in kernel-ready layout, shapes mirroring the PyTorch module.

    fcs1: Linear(state_size, fcs1_units)
    fc2 : Linear(fcs1_units + action_size, fc2_units)   (split into w2s / w2a)
    fc3 : Linear(fc2_units, 1)                           (stored as an 8-row
                                                          replicated bf16 row)
    Matmul weights are stored transposed ((in, out)) and in bf16 (MXU-native);
    biases stay f32.  hidden_init in the reference uses weight.size()[0]
    (= out_features for nn.Linear), reproduced here; bias ranges use the
    nn.Linear default.  This affects training parity only, not the forward.
    """
    ks = jax.random.split(key, 6)

    def u(k, shape, lim):
        return jax.random.uniform(k, shape, jnp.float32, minval=-lim, maxval=lim)

    lim1 = 1.0 / jnp.sqrt(jnp.float32(fcs1_units))
    lim2 = 1.0 / jnp.sqrt(jnp.float32(fc2_units))
    lim3 = 0.003

    w1 = u(ks[0], (state_size, fcs1_units), lim1).astype(jnp.bfloat16)
    b1 = u(ks[1], (1, fcs1_units), 1.0 / jnp.sqrt(jnp.float32(state_size)))

    w2_full = u(ks[2], (fcs1_units + action_size, fc2_units), lim2)
    b2 = u(ks[3], (1, fc2_units),
           1.0 / jnp.sqrt(jnp.float32(fcs1_units + action_size)))
    w2s = w2_full[:fcs1_units].astype(jnp.bfloat16)    # (fcs1, fc2)
    w2a = w2_full[fcs1_units:].astype(jnp.bfloat16)    # (action, fc2)

    w3_row = u(ks[4], (1, fc2_units), lim3).astype(jnp.bfloat16)
    w3 = jnp.tile(w3_row, (8, 1))                      # sublane-aligned MXU M
    b3 = u(ks[5], (1, 1), 1.0 / jnp.sqrt(jnp.float32(fc2_units)))

    return {"w1": w1, "b1": b1, "w2s": w2s, "w2a": w2a, "b2": b2,
            "w3": w3, "b3": b3}


def critic_ddpg_reference(state, action, params):
    """Pure-JAX f32 reference (same stored weights, upcast)."""
    f32 = jnp.float32
    xs = jax.nn.relu(state @ params["w1"].astype(f32) + params["b1"])
    h = jax.nn.relu(xs @ params["w2s"].astype(f32)
                    + action @ params["w2a"].astype(f32) + params["b2"])
    return h @ params["w3"][0:1].astype(f32).T + params["b3"]


if __name__ == "__main__":
    # Small deterministic correctness check (the kernel pays off at batch in
    # the hundreds-to-thousands; tiny shapes here are for verification only).
    STATE_SIZE, ACTION_SIZE = 16, 4
    FCS1_UNITS, FC2_UNITS = 256, 128

    key = jax.random.PRNGKey(0)
    k_state, k_action, k_params = jax.random.split(key, 3)
    params = init_params(k_params, STATE_SIZE, ACTION_SIZE, FCS1_UNITS, FC2_UNITS)

    fwd = jax.jit(critic_ddpg_forward, static_argnames=("batch_tile",))

    # 1) tiny batch -> single grid step.
    B = 8
    state = jax.random.normal(k_state, (B, STATE_SIZE), jnp.float32)
    action = jax.random.normal(k_action, (B, ACTION_SIZE), jnp.float32)
    q = jax.block_until_ready(fwd(state, action, params))
    q_ref = critic_ddpg_reference(state, action, params)
    assert q.shape == (B, 1), q.shape
    assert jnp.allclose(q, q_ref, atol=2e-2, rtol=2e-2), (q, q_ref)

    # 2) multi-tile batch with a ragged tail -> exercises grid + padding path.
    B2 = 250
    state2 = jax.random.normal(k_state, (B2, STATE_SIZE), jnp.float32)
    action2 = jax.random.normal(k_action, (B2, ACTION_SIZE), jnp.float32)
    q2 = jax.block_until_ready(fwd(state2, action2, params, batch_tile=128))
    q2_ref = critic_ddpg_reference(state2, action2, params)
    assert q2.shape == (B2, 1), q2.shape
    assert jnp.allclose(q2, q2_ref, atol=2e-2, rtol=2e-2), (q2, q2_ref)

    print("KERNEL_OK")
</pallas_src>

<mosaic_0001>
module attributes {stable_mosaic.version = 11 : i64} {
  func.func @_critic_kernel(%arg0: i32, %arg1: memref<8x16xf32, #tpu.memory_space<vmem>>, %arg2: memref<8x4xf32, #tpu.memory_space<vmem>>, %arg3: memref<16x256xbf16, #tpu.memory_space<vmem>>, %arg4: memref<1x256xf32, #tpu.memory_space<vmem>>, %arg5: memref<256x128xbf16, #tpu.memory_space<vmem>>, %arg6: memref<4x128xbf16, #tpu.memory_space<vmem>>, %arg7: memref<1x128xf32, #tpu.memory_space<vmem>>, %arg8: memref<8x128xbf16, #tpu.memory_space<vmem>>, %arg9: memref<1x1xf32, #tpu.memory_space<vmem>>, %arg10: memref<1x1x8xf32, #tpu.memory_space<vmem>>) attributes {dimension_semantics = [#tpu.dimension_semantics<parallel>], iteration_bounds = array<i64: 1>, scalar_prefetch = 0 : i64, scratch_operands = 0 : i64, tpu.core_type = #tpu.core_type<tc>, window_params = [{transform_indices = @transform_0, window_bounds = array<i64: 8, 16>}, {transform_indices = @transform_1, window_bounds = array<i64: 8, 4>}, {pipeline_mode = #tpu.pipeline_mode<synchronous>, transform_indices = @transform_2, window_bounds = array<i64: 16, 256>}, {pipeline_mode = #tpu.pipeline_mode<synchronous>, transform_indices = @transform_3, window_bounds = array<i64: 1, 256>}, {pipeline_mode = #tpu.pipeline_mode<synchronous>, transform_indices = @transform_4, window_bounds = array<i64: 256, 128>}, {pipeline_mode = #tpu.pipeline_mode<synchronous>, transform_indices = @transform_5, window_bounds = array<i64: 4, 128>}, {pipeline_mode = #tpu.pipeline_mode<synchronous>, transform_indices = @transform_6, window_bounds = array<i64: 1, 128>}, {pipeline_mode = #tpu.pipeline_mode<synchronous>, transform_indices = @transform_7, window_bounds = array<i64: 8, 128>}, {pipeline_mode = #tpu.pipeline_mode<synchronous>, transform_indices = @transform_8, window_bounds = array<i64: 1, 1>}, {transform_indices = @transform_9, window_bounds = array<i64: 1, 1, 8>}]} {
    %c0 = arith.constant 0 : index
    %c0_0 = arith.constant 0 : index
    %0 = vector.load %arg1[%c0, %c0_0] : memref<8x16xf32, #tpu.memory_space<vmem>>, vector<8x16xf32>
    %1 = arith.truncf %0 : vector<8x16xf32> to vector<8x16xbf16>
    %c0_1 = arith.constant 0 : index
    %c0_2 = arith.constant 0 : index
    %2 = vector.load %arg2[%c0_1, %c0_2] : memref<8x4xf32, #tpu.memory_space<vmem>>, vector<8x4xf32>
    %3 = arith.truncf %2 : vector<8x4xf32> to vector<8x4xbf16>
    %c0_3 = arith.constant 0 : index
    %c0_4 = arith.constant 0 : index
    %4 = vector.load %arg3[%c0_3, %c0_4] : memref<16x256xbf16, #tpu.memory_space<vmem>>, vector<16x256xbf16>
    %cst = arith.constant dense<0.000000e+00> : vector<8x256xf32>
    %5 = tpu.matmul %1, %4, %cst {dimension_numbers = #tpu.dot_dimension_numbers<[1], [0], [0], [1], [0, 0, 1, 1], [], []>} : vector<8x16xbf16>, vector<16x256xbf16>, vector<8x256xf32> -> vector<8x256xf32>
    %c0_5 = arith.constant 0 : index
    %c0_6 = arith.constant 0 : index
    %6 = vector.load %arg4[%c0_5, %c0_6] : memref<1x256xf32, #tpu.memory_space<vmem>>, vector<1x256xf32>
    %7 = vector.broadcast %6 : vector<1x256xf32> to vector<8x256xf32>
    %8 = arith.addf %5, %7 : vector<8x256xf32>
    %cst_7 = arith.constant 0.000000e+00 : f32
    %9 = vector.broadcast %cst_7 : f32 to vector<8x256xf32>
    %10 = arith.maximumf %8, %9 : vector<8x256xf32>
    %11 = arith.truncf %10 : vector<8x256xf32> to vector<8x256xbf16>
    %c0_8 = arith.constant 0 : index
    %c0_9 = arith.constant 0 : index
    %12 = vector.load %arg5[%c0_8, %c0_9] : memref<256x128xbf16, #tpu.memory_space<vmem>>, vector<256x128xbf16>
    %cst_10 = arith.constant dense<0.000000e+00> : vector<8x128xf32>
    %13 = tpu.matmul %11, %12, %cst_10 {dimension_numbers = #tpu.dot_dimension_numbers<[1], [0], [0], [1], [0, 0, 1, 1], [], []>} : vector<8x256xbf16>, vector<256x128xbf16>, vector<8x128xf32> -> vector<8x128xf32>
    %c0_11 = arith.constant 0 : index
    %c0_12 = arith.constant 0 : index
    %14 = vector.load %arg6[%c0_11, %c0_12] : memref<4x128xbf16, #tpu.memory_space<vmem>>, vector<4x128xbf16>
    %cst_13 = arith.constant dense<0.000000e+00> : vector<8x128xf32>
    %15 = tpu.matmul %3, %14, %cst_13 {dimension_numbers = #tpu.dot_dimension_numbers<[1], [0], [0], [1], [0, 0, 1, 1], [], []>} : vector<8x4xbf16>, vector<4x128xbf16>, vector<8x128xf32> -> vector<8x128xf32>
    %16 = arith.addf %13, %15 : vector<8x128xf32>
    %c0_14 = arith.constant 0 : index
    %c0_15 = arith.constant 0 : index
    %17 = vector.load %arg7[%c0_14, %c0_15] : memref<1x128xf32, #tpu.memory_space<vmem>>, vector<1x128xf32>
    %18 = vector.broadcast %17 : vector<1x128xf32> to vector<8x128xf32>
    %19 = arith.addf %16, %18 : vector<8x128xf32>
    %cst_16 = arith.constant 0.000000e+00 : f32
    %20 = vector.broadcast %cst_16 : f32 to vector<8x128xf32>
    %21 = arith.maximumf %19, %20 : vector<8x128xf32>
    %22 = tpu.transpose %21, [1, 0] : vector<8x128xf32> -> vector<128x8xf32>
    %23 = arith.truncf %22 : vector<128x8xf32> to vector<128x8xbf16>
    %c0_17 = arith.constant 0 : index
    %c0_18 = arith.constant 0 : index
    %24 = vector.load %arg8[%c0_17, %c0_18] : memref<8x128xbf16, #tpu.memory_space<vmem>>, vector<8x128xbf16>
    %cst_19 = arith.constant dense<0.000000e+00> : vector<8x8xf32>
    %25 = tpu.matmul %24, %23, %cst_19 {dimension_numbers = #tpu.dot_dimension_numbers<[1], [0], [0], [1], [0, 0, 1, 1], [], []>} : vector<8x128xbf16>, vector<128x8xbf16>, vector<8x8xf32> -> vector<8x8xf32>
    %26 = vector.extract_strided_slice %25 {offsets = [0, 0], sizes = [1, 8], strides = [1, 1]} : vector<8x8xf32> to vector<1x8xf32>
    %c0_20 = arith.constant 0 : index
    %c0_21 = arith.constant 0 : index
    %27 = vector.load %arg9[%c0_20, %c0_21] : memref<1x1xf32, #tpu.memory_space<vmem>>, vector<1x1xf32>
    %28 = vector.broadcast %27 : vector<1x1xf32> to vector<1x8xf32>
    %29 = arith.addf %26, %28 : vector<1x8xf32>
    %c0_22 = arith.constant 0 : index
    %c0_23 = arith.constant 0 : index
    %c0_24 = arith.constant 0 : index
    %30 = vector.load %arg10[%c0_22, %c0_23, %c0_24] : memref<1x1x8xf32, #tpu.memory_space<vmem>>, vector<1x1x8xf32>
    %31 = vector.shape_cast %30 : vector<1x1x8xf32> to vector<1x8xf32>
    %32 = vector.shape_cast %29 : vector<1x8xf32> to vector<1x1x8xf32>
    tpu.vector_store %arg10[%c0_22, %c0_23, %c0_24], %32 {strides = array<i32>} : memref<1x1x8xf32, #tpu.memory_space<vmem>>, vector<1x1x8xf32>,
    return
  }
  func.func @transform_0(%arg0: i32) -> (i32, i32) {
    %c0_i32 = arith.constant 0 : i32
    %c0_i32_0 = arith.constant 0 : i32
    return %arg0, %c0_i32 : i32, i32
  }
  func.func @transform_1(%arg0: i32) -> (i32, i32) {
    %c0_i32 = arith.constant 0 : i32
    %c0_i32_0 = arith.constant 0 : i32
    return %arg0, %c0_i32 : i32, i32
  }
  func.func @transform_2(%arg0: i32) -> (i32, i32) {
    %c0_i32 = arith.constant 0 : i32
    %c0_i32_0 = arith.constant 0 : i32
    %c0_i32_1 = arith.constant 0 : i32
    return %c0_i32, %c0_i32_0 : i32, i32
  }
  func.func @transform_3(%arg0: i32) -> (i32, i32) {
    %c0_i32 = arith.constant 0 : i32
    %c0_i32_0 = arith.constant 0 : i32
    %c0_i32_1 = arith.constant 0 : i32
    return %c0_i32, %c0_i32_0 : i32, i32
  }
  func.func @transform_4(%arg0: i32) -> (i32, i32) {
    %c0_i32 = arith.constant 0 : i32
    %c0_i32_0 = arith.constant 0 : i32
    %c0_i32_1 = arith.constant 0 : i32
    return %c0_i32, %c0_i32_0 : i32, i32
  }
  func.func @transform_5(%arg0: i32) -> (i32, i32) {
    %c0_i32 = arith.constant 0 : i32
    %c0_i32_0 = arith.constant 0 : i32
    %c0_i32_1 = arith.constant 0 : i32
    return %c0_i32, %c0_i32_0 : i32, i32
  }
  func.func @transform_6(%arg0: i32) -> (i32, i32) {
    %c0_i32 = arith.constant 0 : i32
    %c0_i32_0 = arith.constant 0 : i32
    %c0_i32_1 = arith.constant 0 : i32
    return %c0_i32, %c0_i32_0 : i32, i32
  }
  func.func @transform_7(%arg0: i32) -> (i32, i32) {
    %c0_i32 = arith.constant 0 : i32
    %c0_i32_0 = arith.constant 0 : i32
    %c0_i32_1 = arith.constant 0 : i32
    return %c0_i32, %c0_i32_0 : i32, i32
  }
  func.func @transform_8(%arg0: i32) -> (i32, i32) {
    %c0_i32 = arith.constant 0 : i32
    %c0_i32_0 = arith.constant 0 : i32
    %c0_i32_1 = arith.constant 0 : i32
    return %c0_i32, %c0_i32_0 : i32, i32
  }
  func.func @transform_9(%arg0: i32) -> (i32, i32, i32) {
    %c0_i32 = arith.constant 0 : i32
    %c0_i32_0 = arith.constant 0 : i32
    %c0_i32_1 = arith.constant 0 : i32
    return %arg0, %c0_i32, %c0_i32_0 : i32, i32, i32
  }
}

</mosaic_0001>

<llo_original>
// kernel: critic_ddpg_forward.1
$region0: #{critic_ddpg_forward.1}
  #allocation0 [shape = 'u32[]', space=smem, size = 0x4, offset = 0x4, fixed_abs, tag = 'smem constant byte address 0x4 - core index']
  #allocation1 [shape = 'u32[144,128]{1,0:T(1,128)}', space=vmem, size = 0x12000, scoped, tag = 'internal scratch']
  #allocation2 [shape = 'f32[1,1]{1,0:T(1,128)S(1)}', space=vmem, size = 0x200, scoped, tag = 'scoped memory for critic_ddpg_forward.1']
  %s0 = inlined_call_operand.hbm [shape: f32[8,16], index: 0, kind: input, shape index: {}]
  %s1 = inlined_call_operand.vmem [shape: f32[8,4], index: 1, kind: input, shape index: {}]
  %s2 = inlined_call_operand.vmem [shape: bf16[16,256], index: 2, kind: input, shape index: {}]
  %s3 = inlined_call_operand.hbm [shape: f32[1,256], index: 3, kind: input, shape index: {}]
  %s4 = inlined_call_operand.hbm [shape: bf16[256,128], index: 4, kind: input, shape index: {}]
  %s5 = inlined_call_operand.vmem [shape: bf16[4,128], index: 5, kind: input, shape index: {}]
  %s6 = inlined_call_operand.vmem [shape: f32[1,128], index: 6, kind: input, shape index: {}]
  %s7 = inlined_call_operand.vmem [shape: bf16[8,128], index: 7, kind: input, shape index: {}]
  %s8 = inlined_call_operand.<no memory space> [shape: f32[1,1], index: 8, kind: input, shape index: {}]
  %s9 = inlined_call_operand.hbm [shape: f32[1,1,8], index: 9, kind: output, shape index: {}]
  %s10 = sld [smem:[#allocation0]]
  $region58: #{critic_ddpg_forward.1} parent=0
    _
  %s12 = ssub.s32 1, %s10
  %s13 = scalar_select 0, %s12, %s10
  %v14 = vstv %s8
  %15 = vst [vmem:[#allocation2] sm:$0x1] %v14
  $region1: #{critic_ddpg_forward.1} parent=0
    #allocation3 [shape = 'u8[4096]{0}', space=vmem, size = 0x1000, scoped, tag = 'input window, operand 0, single buffered']
    #allocation4 [shape = 's32[1]{0}', space=sflag, size = 0x4, scoped, tag = 'scoped memory for critic_ddpg_forward.1']
    #allocation5 [shape = 's32[1]{0}', space=sflag, size = 0x4, scoped, tag = 'scoped memory for critic_ddpg_forward.1']
    #allocation6 [shape = 'u8[1024]{0}', space=vmem, size = 0x400, scoped, tag = 'input window, operand 3, single buffered']
    #allocation7 [shape = 's32[1]{0}', space=sflag, size = 0x4, scoped, tag = 'scoped memory for critic_ddpg_forward.1']
    #allocation8 [shape = 'u8[65536]{0}', space=vmem, size = 0x10000, scoped, tag = 'input window, operand 4, single buffered']
    #allocation9 [shape = 'u8[512]{0}', space=vmem, size = 0x400, scoped, tag = 'output window, operand 0, single buffered']
    %16 = vsyncpa [#allocation4], 0
    %17 = vsyncpa [#allocation7], 0
    %18 = vsyncpa [#allocation5], 0
    // Predicated region
    $region2: #{critic_ddpg_forward.1} parent=1 // pred_check
      _
    $region3: #{critic_ddpg_forward.1} parent=1 // pred_check_branch
      %20 = sbr.rel (0) target = $region5
    $region4: #{critic_ddpg_forward.1} parent=1 // pred_region
      %s22 = ssub.s32 128, 128
      %23 = vsyncadd [#allocation4], %s22
      %s25 = sshll.u32 [#allocation3], 4
      %s26 = int_to_ptr.vmem [resolvable:$true] %s25
      %28 = dma.hbm_to_vmem [thread:$0]  %s0, 128, %s26, [#allocation4]
    $region5: #{critic_ddpg_forward.1} parent=1 // pred_fallthru
      _
    // Predicated region
    $region6: #{critic_ddpg_forward.1} parent=1 // pred_check
      _
    $region7: #{critic_ddpg_forward.1} parent=1 // pred_check_branch
      %30 = sbr.rel (0) target = $region9
    $region8: #{critic_ddpg_forward.1} parent=1 // pred_region
      _
    $region9: #{critic_ddpg_forward.1} parent=1 // pred_fallthru
      _
    // Predicated region
    $region10: #{critic_ddpg_forward.1} parent=1 // pred_check
      _
    $region11: #{critic_ddpg_forward.1} parent=1 // pred_check_branch
      %32 = sbr.rel (0) target = $region13
    $region12: #{critic_ddpg_forward.1} parent=1 // pred_region
      _
    $region13: #{critic_ddpg_forward.1} parent=1 // pred_fallthru
      _
    // Predicated region
    $region14: #{critic_ddpg_forward.1} parent=1 // pred_check
      _
    $region15: #{critic_ddpg_forward.1} parent=1 // pred_check_branch
      %34 = sbr.rel (0) target = $region17
    $region16: #{critic_ddpg_forward.1} parent=1 // pred_region
      %s36 = ssub.s32 32, 32
      %37 = vsyncadd [#allocation7], %s36
      %s39 = sshll.u32 [#allocation6], 4
      %s40 = int_to_ptr.vmem [resolvable:$true] %s39
      %42 = dma.hbm_to_vmem [thread:$0]  %s3, 32, %s40, [#allocation7]
    $region17: #{critic_ddpg_forward.1} parent=1 // pred_fallthru
      _
    // Predicated region
    $region18: #{critic_ddpg_forward.1} parent=1 // pred_check
      _
    $region19: #{critic_ddpg_forward.1} parent=1 // pred_check_branch
      %44 = sbr.rel (0) target = $region21
    $region20: #{critic_ddpg_forward.1} parent=1 // pred_region
      %s46 = ssub.s32 2048, 2048
      %47 = vsyncadd [#allocation7], %s46
      %s48 = sshll.u32 [#allocation8], 4
      %s49 = int_to_ptr.vmem [resolvable:$true] %s48
      %54 = dma.hbm_to_vmem [thread:$0]  %s4, 2048, %s49, [#allocation7], 64, 64, 4
    $region21: #{critic_ddpg_forward.1} parent=1 // pred_fallthru
      _
    // Predicated region
    $region22: #{critic_ddpg_forward.1} parent=1 // pred_check
      _
    $region23: #{critic_ddpg_forward.1} parent=1 // pred_check_branch
      %56 = sbr.rel (0) target = $region25
    $region24: #{critic_ddpg_forward.1} parent=1 // pred_region
      _
    $region25: #{critic_ddpg_forward.1} parent=1 // pred_fallthru
      _
    // Predicated region
    $region26: #{critic_ddpg_forward.1} parent=1 // pred_check
      _
    $region27: #{critic_ddpg_forward.1} parent=1 // pred_check_branch
      %58 = sbr.rel (0) target = $region29
    $region28: #{critic_ddpg_forward.1} parent=1 // pred_region
      _
    $region29: #{critic_ddpg_forward.1} parent=1 // pred_fallthru
      _
    // Predicated region
    $region30: #{critic_ddpg_forward.1} parent=1 // pred_check
      _
    $region31: #{critic_ddpg_forward.1} parent=1 // pred_check_branch
      %60 = sbr.rel (0) target = $region33
    $region32: #{critic_ddpg_forward.1} parent=1 // pred_region
      _
    $region33: #{critic_ddpg_forward.1} parent=1 // pred_fallthru
      _
    // Predicated region
    $region34: #{critic_ddpg_forward.1} parent=1 // pred_check
      _
    $region35: #{critic_ddpg_forward.1} parent=1 // pred_check_branch
      %62 = sbr.rel (0) target = $region37
    $region36: #{critic_ddpg_forward.1} parent=1 // pred_region
      _
    $region37: #{critic_ddpg_forward.1} parent=1 // pred_fallthru
      _
    // Predicated region
    $region38: #{critic_ddpg_forward.1} parent=1 // pred_check
      _
    $region39: #{critic_ddpg_forward.1} parent=1 // pred_check_branch
      %64 = sbr.rel (0) target = $region41
    $region40: #{critic_ddpg_forward.1} parent=1 // pred_region
      %65 = dma.done [#allocation4], 128
    $region41: #{critic_ddpg_forward.1} parent=1 // pred_fallthru
      _
    // Predicated region
    $region42: #{critic_ddpg_forward.1} parent=1 // pred_check
      _
    $region43: #{critic_ddpg_forward.1} parent=1 // pred_check_branch
      %67 = sbr.rel (0) target = $region45
    $region44: #{critic_ddpg_forward.1} parent=1 // pred_region
      %68 = dma.done [#allocation7], 32
    $region45: #{critic_ddpg_forward.1} parent=1 // pred_fallthru
      _
    // Predicated region
    $region46: #{critic_ddpg_forward.1} parent=1 // pred_check
      _
    $region47: #{critic_ddpg_forward.1} parent=1 // pred_check_branch
      %70 = sbr.rel (0) target = $region49
    $region48: #{critic_ddpg_forward.1} parent=1 // pred_region
      %71 = dma.done [#allocation7], 2048
    $region49: #{critic_ddpg_forward.1} parent=1 // pred_fallthru
      _
    %v73 = vld [vmem:[#allocation3] sm:$0xff]
    %v74 = vpack.c.bf16 %v73, %v73
    %v75 = vld [vmem:[%s1] sm:$0xff]
    %v76 = vpack.c.bf16 %v75, %v75
    %v77 = vld [vmem:[%s2] sm:$0xff]
    %v78 = vld [vmem:[%s2 + $0x8] sm:$0xff]
    %v79 = vld [vmem:[#allocation6] sm:$0x3]
    %v81 = vlaneseq
    %v82 = vshrl.u32 %v81, 7
    %v83 = vsub.s32 0, %v82
    %v84 = vrot.slane %v79, %v83
    %v85 = vlaneseq
    %v86 = vshrl.u32 %v85, 7
    %v87 = vsub.s32 1, %v86
    %v88 = vrot.slane %v79, %v87
    %v93 = vunpack.c.l.b16 %v77
    %v94 = vunpack.c.h.b16 %v77
    %v95 = vunpack.c.l.b16 %v78
    %v96 = vunpack.c.h.b16 %v78
    %v97 = vpack.c.b16 %v95, %v93
    %v98 = vpack.c.b16 %v96, %v94
    %vm101 = vcmask 130048
    %v103 = vsel %vm101, %v74, 0
    %105 = vmatprep.subr.bf16.mxu0 0
    %106 = vmatpush1.bf16.msra.mxu0 0
    %107 = vmatprep.subr.bf16.mxu0 0
    %108 = vmatpush1.bf16.msra.mxu0 0
    %109 = vmatprep.subr.bf16.mxu0 0
    %110 = vmatpush1.bf16.msra.mxu0 0
    %111 = vmatprep.subr.bf16.mxu0 0
    %112 = vmatpush1.bf16.msra.mxu0 0
    %113 = vmatprep.subr.bf16.mxu0 0
    %114 = vmatpush1.bf16.msra.mxu0 0
    %115 = vmatprep.subr.bf16.mxu0 0
    %116 = vmatpush1.bf16.msra.mxu0 0
    %117 = vmatprep.subr.bf16.mxu0 0
    %118 = vmatpush1.bf16.msra.mxu0 0
    %119 = vmatprep.subr.bf16.mxu0 %v98
    %120 = vmatpush1.bf16.msra.mxu0 %v97
    %121 = vmatprep.subr.bf16.mxu0 0
    %122 = vmatpush2.bf16.msra.mxu0 0
    %123 = vmatprep.subr.bf16.mxu0 0
    %124 = vmatpush2.bf16.msra.mxu0 0
    %125 = vmatprep.subr.bf16.mxu0 0
    %126 = vmatpush2.bf16.msra.mxu0 0
    %127 = vmatprep.subr.bf16.mxu0 0
    %128 = vmatpush2.bf16.msra.mxu0 0
    %129 = vmatprep.subr.bf16.mxu0 0
    %130 = vmatpush2.bf16.msra.mxu0 0
    %131 = vmatprep.subr.bf16.mxu0 0
    %132 = vmatpush2.bf16.msra.mxu0 0
    %133 = vmatprep.subr.bf16.mxu0 0
    %134 = vmatpush2.bf16.msra.mxu0 0
    %135 = vmatprep.subr.bf16.mxu0 0
    %136 = vmatpush2.bf16.msra.mxu0 0
    %137 = vmatprep.mubr.bf16.mxu0 0
    %138 = vmatmul.mubr.bf16.gmra.mxu0 %v103
    %v139 = vpop.f32.mrf.mxu0
    %v140 = vadd.f32 %v84, %v139
    %v141 = vpop.f32.mrf.mxu0
    %v142 = vadd.f32 %v88, %v141
    %v143 = vpop.f32.mrf.mxu0
    %v144 = vpop.f32.mrf.mxu0
    %145 = vdwg.mxu0
    %v146 = vmax.f32 %v140, 0.0
    %v147 = vmax.f32 %v142, 0.0
    %v148 = vpack.c.bf16 %v146, %v146
    %v149 = vpack.c.bf16 %v147, %v147
    %v150 = vld [vmem:[#allocation8] sm:$0xf]
    %v151 = vld [vmem:[#allocation8 + $0x4] sm:$0xf]
    %v152 = vld [vmem:[#allocation8 + $0x8] sm:$0xf]
    %v153 = vld [vmem:[#allocation8 + $0xc] sm:$0xf]
    %v154 = vld [vmem:[#allocation8 + $0x10] sm:$0xf]
    %v155 = vld [vmem:[#allocation8 + $0x14] sm:$0xf]
    %v156 = vld [vmem:[#allocation8 + $0x18] sm:$0xf]
    %v157 = vld [vmem:[#allocation8 + $0x1c] sm:$0xf]
    %v158 = vld [vmem:[#allocation8 + $0x20] sm:$0xf]
    %v159 = vld [vmem:[#allocation8 + $0x24] sm:$0xf]
    %v160 = vld [vmem:[#allocation8 + $0x28] sm:$0xf]
    %v161 = vld [vmem:[#allocation8 + $0x2c] sm:$0xf]
    %v162 = vld [vmem:[#allocation8 + $0x30] sm:$0xf]
    %v163 = vld [vmem:[#allocation8 + $0x34] sm:$0xf]
    %v164 = vld [vmem:[#allocation8 + $0x38] sm:$0xf]
    %v165 = vld [vmem:[#allocation8 + $0x3c] sm:$0xf]
    %v166 = vld [vmem:[#allocation8 + $0x40] sm:$0xf]
    %v167 = vld [vmem:[#allocation8 + $0x44] sm:$0xf]
    %v168 = vld [vmem:[#allocation8 + $0x48] sm:$0xf]
    %v169 = vld [vmem:[#allocation8 + $0x4c] sm:$0xf]
    %v170 = vld [vmem:[#allocation8 + $0x50] sm:$0xf]
    %v171 = vld [vmem:[#allocation8 + $0x54] sm:$0xf]
    %v172 = vld [vmem:[#allocation8 + $0x58] sm:$0xf]
    %v173 = vld [vmem:[#allocation8 + $0x5c] sm:$0xf]
    %v174 = vld [vmem:[#allocation8 + $0x60] sm:$0xf]
    %v175 = vld [vmem:[#allocation8 + $0x64] sm:$0xf]
    %v176 = vld [vmem:[#allocation8 + $0x68] sm:$0xf]
    %v177 = vld [vmem:[#allocation8 + $0x6c] sm:$0xf]
    %v178 = vld [vmem:[#allocation8 + $0x70] sm:$0xf]
    %v179 = vld [vmem:[#allocation8 + $0x74] sm:$0xf]
    %v180 = vld [vmem:[#allocation8 + $0x78] sm:$0xf]
    %v181 = vld [vmem:[#allocation8 + $0x7c] sm:$0xf]
    %v182 = vld [vmem:[%s5] sm:$0x3]
    %vm183 = vcmask 31744
    %v185 = vsel %vm183, %v76, 0
    %vm187 = vcmask 1041408
    %v189 = vsel %vm187, %v182, 0
    %191 = vmatprep.subr.bf16.mxu0 0
    %192 = vmatpush1.bf16.msra.mxu0 0
    %193 = vmatprep.subr.bf16.mxu0 0
    %194 = vmatpush1.bf16.msra.mxu0 0
    %195 = vmatprep.subr.bf16.mxu0 0
    %196 = vmatpush1.bf16.msra.mxu0 0
    %197 = vmatprep.subr.bf16.mxu0 0
    %198 = vmatpush1.bf16.msra.mxu0 0
    %199 = vmatprep.subr.bf16.mxu0 0
    %200 = vmatpush1.bf16.msra.mxu0 0
    %201 = vmatprep.subr.bf16.mxu0 0
    %202 = vmatpush1.bf16.msra.mxu0 0
    %203 = vmatprep.subr.bf16.mxu0 0
    %204 = vmatpush1.bf16.msra.mxu0 0
    %205 = vmatprep.subr.bf16.mxu0 0
    %206 = vmatpush1.bf16.msra.mxu0 %v189
    %207 = vmatprep.subr.bf16.mxu0 0
    %208 = vmatpush2.bf16.msra.mxu0 0
    %209 = vmatprep.subr.bf16.mxu0 0
    %210 = vmatpush2.bf16.msra.mxu0 0
    %211 = vmatprep.subr.bf16.mxu0 0
    %212 = vmatpush2.bf16.msra.mxu0 0
    %213 = vmatprep.subr.bf16.mxu0 0
    %214 = vmatpush2.bf16.msra.mxu0 0
    %215 = vmatprep.subr.bf16.mxu0 0
    %216 = vmatpush2.bf16.msra.mxu0 0
    %217 = vmatprep.subr.bf16.mxu0 0
    %218 = vmatpush2.bf16.msra.mxu0 0
    %219 = vmatprep.subr.bf16.mxu0 0
    %220 = vmatpush2.bf16.msra.mxu0 0
    %221 = vmatprep.subr.bf16.mxu0 0
    %222 = vmatpush2.bf16.msra.mxu0 0
    %223 = vmatprep.mubr.bf16.mxu0 0
    %224 = vmatmul.mubr.bf16.gmra.mxu0 %v185
    %v225 = vpop.f32.mrf.mxu0
    %v226 = vadd.f32 0.0, %v225
    %v227 = vpop.f32.mrf.mxu0
    %v228 = vpop.f32.mrf.mxu0
    %v229 = vpop.f32.mrf.mxu0
    %230 = vdwg.mxu0
    %v263 = vunpack.c.l.b16 %v150
    %v264 = vunpack.c.l.b16 %v151
    %v265 = vunpack.c.l.b16 %v152
    %v266 = vunpack.c.l.b16 %v153
    %v267 = vunpack.c.l.b16 %v154
    %v268 = vunpack.c.l.b16 %v155
    %v269 = vunpack.c.l.b16 %v156
    %v270 = vunpack.c.l.b16 %v157
    %v271 = vunpack.c.l.b16 %v158
    %v272 = vunpack.c.l.b16 %v159
    %v273 = vunpack.c.l.b16 %v160
    %v274 = vunpack.c.l.b16 %v161
    %v275 = vunpack.c.l.b16 %v162
    %v276 = vunpack.c.l.b16 %v163
    %v277 = vunpack.c.l.b16 %v164
    %v278 = vunpack.c.l.b16 %v165
    %v279 = vunpack.c.l.b16 %v166
    %v280 = vunpack.c.l.b16 %v167
    %v281 = vunpack.c.l.b16 %v168
    %v282 = vunpack.c.l.b16 %v169
    %v283 = vunpack.c.l.b16 %v170
    %v284 = vunpack.c.l.b16 %v171
    %v285 = vunpack.c.l.b16 %v172
    %v286 = vunpack.c.l.b16 %v173
    %v287 = vunpack.c.l.b16 %v174
    %v288 = vunpack.c.l.b16 %v175
    %v289 = vunpack.c.l.b16 %v176
    %v290 = vunpack.c.l.b16 %v177
    %v291 = vunpack.c.l.b16 %v178
    %v292 = vunpack.c.l.b16 %v179
    %v293 = vunpack.c.l.b16 %v180
    %v294 = vunpack.c.l.b16 %v181
    %v295 = vpack.c.b16 %v264, %v263
    %v296 = vpack.c.b16 %v266, %v265
    %v297 = vpack.c.b16 %v268, %v267
    %v298 = vpack.c.b16 %v270, %v269
    %v299 = vpack.c.b16 %v272, %v271
    %v300 = vpack.c.b16 %v274, %v273
    %v301 = vpack.c.b16 %v276, %v275
    %v302 = vpack.c.b16 %v278, %v277
    %v303 = vpack.c.b16 %v280, %v279
    %v304 = vpack.c.b16 %v282, %v281
    %v305 = vpack.c.b16 %v284, %v283
    %v306 = vpack.c.b16 %v286, %v285
    %v307 = vpack.c.b16 %v288, %v287
    %v308 = vpack.c.b16 %v290, %v289
    %v309 = vpack.c.b16 %v292, %v291
    %v310 = vpack.c.b16 %v294, %v293
    %327 = vmatprep.subr.bf16.mxu0 0
    %328 = vmatpush1.bf16.msra.mxu0 %v302
    %329 = vmatprep.subr.bf16.mxu0 0
    %330 = vmatpush1.bf16.msra.mxu0 %v301
    %331 = vmatprep.subr.bf16.mxu0 0
    %332 = vmatpush1.bf16.msra.mxu0 %v300
    %333 = vmatprep.subr.bf16.mxu0 0
    %334 = vmatpush1.bf16.msra.mxu0 %v299
    %335 = vmatprep.subr.bf16.mxu0 0
    %336 = vmatpush1.bf16.msra.mxu0 %v298
    %337 = vmatprep.subr.bf16.mxu0 0
    %338 = vmatpush1.bf16.msra.mxu0 %v297
    %339 = vmatprep.subr.bf16.mxu0 0
    %340 = vmatpush1.bf16.msra.mxu0 %v296
    %341 = vmatprep.subr.bf16.mxu0 0
    %342 = vmatpush1.bf16.msra.mxu0 %v295
    %343 = vmatprep.subr.bf16.mxu0 0
    %344 = vmatpush2.bf16.msra.mxu0 %v310
    %345 = vmatprep.subr.bf16.mxu0 0
    %346 = vmatpush2.bf16.msra.mxu0 %v309
    %347 = vmatprep.subr.bf16.mxu0 0
    %348 = vmatpush2.bf16.msra.mxu0 %v308
    %349 = vmatprep.subr.bf16.mxu0 0
    %350 = vmatpush2.bf16.msra.mxu0 %v307
    %351 = vmatprep.subr.bf16.mxu0 0
    %352 = vmatpush2.bf16.msra.mxu0 %v306
    %353 = vmatprep.subr.bf16.mxu0 0
    %354 = vmatpush2.bf16.msra.mxu0 %v305
    %355 = vmatprep.subr.bf16.mxu0 0
    %356 = vmatpush2.bf16.msra.mxu0 %v304
    %357 = vmatprep.subr.bf16.mxu0 0
    %358 = vmatpush2.bf16.msra.mxu0 %v303
    %359 = vmatprep.mubr.bf16.mxu0 %v149
    %360 = vmatmul.mubr.bf16.gmra.mxu0 %v148
    %v361 = vpop.f32.mrf.mxu0
    %v362 = vadd.f32 %v226, %v361
    %v363 = vpop.f32.mrf.mxu0
    %v364 = vpop.f32.mrf.mxu0
    %v365 = vpop.f32.mrf.mxu0
    %366 = vdwg.mxu0
    %v367 = vld [vmem:[%s6] sm:$0x1]
    %v369 = vlaneseq
    %v370 = vshrl.u32 %v369, 7
    %v371 = vsub.s32 0, %v370
    %v372 = vrot.slane %v367, %v371
    %v374 = vadd.f32 %v362, %v372
    %v375 = vmax.f32 %v374, 0.0
    %376 = vxpose.xlu0.b32.start [1/16] %v375, 128
    %377 = vxpose.xlu0.b32.cont [2/16] 0.0, 128
    %378 = vxpose.xlu0.b32.cont [3/16] 0.0, 128
    %379 = vxpose.xlu0.b32.cont [4/16] 0.0, 128
    %380 = vxpose.xlu0.b32.cont [5/16] 0.0, 128
    %381 = vxpose.xlu0.b32.cont [6/16] 0.0, 128
    %382 = vxpose.xlu0.b32.cont [7/16] 0.0, 128
    %383 = vxpose.xlu0.b32.cont [8/16] 0.0, 128
    %384 = vxpose.xlu0.b32.cont [9/16] 0.0, 128
    %385 = vxpose.xlu0.b32.cont [10/16] 0.0, 128
    %386 = vxpose.xlu0.b32.cont [11/16] 0.0, 128
    %387 = vxpose.xlu0.b32.cont [12/16] 0.0, 128
    %388 = vxpose.xlu0.b32.cont [13/16] 0.0, 128
    %389 = vxpose.xlu0.b32.cont [14/16] 0.0, 128
    %390 = vxpose.xlu0.b32.cont [15/16] 0.0, 128
    %391 = vxpose.xlu0.b32.end [16/16] 0.0, 128
    %v392 = vpop.trf.xlu0
    %v393 = vpop.trf.xlu0
    %v394 = vpop.trf.xlu0
    %v395 = vpop.trf.xlu0
    %v396 = vpop.trf.xlu0
    %v397 = vpop.trf.xlu0
    %v398 = vpop.trf.xlu0
    %v399 = vpop.trf.xlu0
    %v400 = vpop.trf.xlu0
    %v401 = vpop.trf.xlu0
    %v402 = vpop.trf.xlu0
    %v403 = vpop.trf.xlu0
    %v404 = vpop.trf.xlu0
    %v405 = vpop.trf.xlu0
    %v406 = vpop.trf.xlu0
    %v407 = vpop.trf.xlu0
    %v408 = vpack.c.bf16 %v393, %v392
    %v409 = vpack.c.bf16 %v395, %v394
    %v410 = vpack.c.bf16 %v397, %v396
    %v411 = vpack.c.bf16 %v399, %v398
    %v412 = vpack.c.bf16 %v401, %v400
    %v413 = vpack.c.bf16 %v403, %v402
    %v414 = vpack.c.bf16 %v405, %v404
    %v415 = vpack.c.bf16 %v407, %v406
    %v416 = vld [vmem:[%s7] sm:$0xf]
    %417 = vmatprep.subr.bf16.mxu0 0
    %418 = vmatpush1.bf16.msra.mxu0 %v415
    %419 = vmatprep.subr.bf16.mxu0 0
    %420 = vmatpush1.bf16.msra.mxu0 %v414
    %421 = vmatprep.subr.bf16.mxu0 0
    %422 = vmatpush1.bf16.msra.mxu0 %v413
    %423 = vmatprep.subr.bf16.mxu0 0
    %424 = vmatpush1.bf16.msra.mxu0 %v412
    %425 = vmatprep.subr.bf16.mxu0 0
    %426 = vmatpush1.bf16.msra.mxu0 %v411
    %427 = vmatprep.subr.bf16.mxu0 0
    %428 = vmatpush1.bf16.msra.mxu0 %v410
    %429 = vmatprep.subr.bf16.mxu0 0
    %430 = vmatpush1.bf16.msra.mxu0 %v409
    %431 = vmatprep.subr.bf16.mxu0 0
    %432 = vmatpush1.bf16.msra.mxu0 %v408
    %433 = vmatprep.subr.bf16.mxu0 0
    %434 = vmatpush2.bf16.msra.mxu0 0
    %435 = vmatprep.subr.bf16.mxu0 0
    %436 = vmatpush2.bf16.msra.mxu0 0
    %437 = vmatprep.subr.bf16.mxu0 0
    %438 = vmatpush2.bf16.msra.mxu0 0
    %439 = vmatprep.subr.bf16.mxu0 0
    %440 = vmatpush2.bf16.msra.mxu0 0
    %441 = vmatprep.subr.bf16.mxu0 0
    %442 = vmatpush2.bf16.msra.mxu0 0
    %443 = vmatprep.subr.bf16.mxu0 0
    %444 = vmatpush2.bf16.msra.mxu0 0
    %445 = vmatprep.subr.bf16.mxu0 0
    %446 = vmatpush2.bf16.msra.mxu0 0
    %447 = vmatprep.subr.bf16.mxu0 0
    %448 = vmatpush2.bf16.msra.mxu0 0
    %449 = vmatprep.mubr.bf16.mxu0 0
    %450 = vmatmul.mubr.bf16.gmra.mxu0 %v416
    %v451 = vpop.f32.mrf.mxu0
    %v452 = vadd.f32 0.0, %v451
    %v453 = vpop.f32.mrf.mxu0
    %v454 = vpop.f32.mrf.mxu0
    %v455 = vpop.f32.mrf.mxu0
    %456 = vdwg.mxu0
    %v457 = vld [vmem:[#allocation2] sm:$0x1]
    %459 = vset.pattern.permute.xlu0 0
    %460 = vperm.xlu0 %459, %v457
    %v461 = vpop.permute.xlu0 %460
    %v463 = vlaneseq
    %v464 = vshrl.u32 %v463, 7
    %v465 = vsub.s32 0, %v464
    %v466 = vrot.slane %v461, %v465
    %v467 = vadd.f32 %v452, %v466
    %vm468 = vcmask 57344
    %469 = vst.msk [vmem:[#allocation9] sm:$0x1] %vm468, %v467
    // Predicated region
    $region50: #{critic_ddpg_forward.1} parent=1 // pred_check
      _
    $region51: #{critic_ddpg_forward.1} parent=1 // pred_check_branch
      %471 = sbr.rel (0) target = $region53
    $region52: #{critic_ddpg_forward.1} parent=1 // pred_region
      %s473 = ssub.s32 16, 16
      %474 = vsyncadd [#allocation5], %s473
      %s476 = sshll.u32 [#allocation9], 4
      %s477 = int_to_ptr.vmem [resolvable:$true] %s476
      %479 = dma.vmem_to_hbm [thread:$0]  %s477, 16, %s9, [#allocation5]
    $region53: #{critic_ddpg_forward.1} parent=1 // pred_fallthru
      _
    // Predicated region
    $region54: #{critic_ddpg_forward.1} parent=1 // pred_check
      _
    $region55: #{critic_ddpg_forward.1} parent=1 // pred_check_branch
      %481 = sbr.rel (0) target = $region57
    $region56: #{critic_ddpg_forward.1} parent=1 // pred_region
      %482 = dma.done [#allocation5], 16
    $region57: #{critic_ddpg_forward.1} parent=1 // pred_fallthru
      _
    %483 = vsyncpa [#allocation4], 1
    %484 = vsyncpa [#allocation7], 1
    %485 = vsyncpa [#allocation5], 1

</llo_original>
